<compile_context>
chip_gen: v6e
topology: v6e:2x2x1
jax: 0.10.0
libtpu: 0.0.40
codegen_flags: <defaults>
</compile_context>

<pallas_src>
import jax
import jax.numpy as jnp
from jax.experimental import pallas as pl
from jax.experimental.pallas import tpu as pltpu


def _aff_kernel(x_ref, r_ref, wa_ref, ba_ref, wb_ref, bb_ref, o_ref):
    # Blocks are (1, C, ts); drop the leading singleton batch dim.
    x = x_ref[0].astype(jnp.float32)          # (C, ts)
    res = r_ref[0].astype(jnp.float32)        # (C, ts)
    xa = (x + res).astype(jnp.bfloat16)       # bf16 MXU operand, exact products

    # Fused first 1x1 convs of both branches (BN scale folded into weights):
    #   (2Cr, C) @ (C, ts) -> (2Cr, ts), f32 accumulation, then bias + ReLU.
    h = jnp.dot(wa_ref[...], xa, preferred_element_type=jnp.float32)
    h = jnp.maximum(h + ba_ref[...], 0.0).astype(jnp.bfloat16)

    # Fused second 1x1 convs; weights/bias are pre-negated, so z == -(xl + xg).
    z = jnp.dot(wb_ref[...], h, preferred_element_type=jnp.float32)
    z = z + bb_ref[...]

    # sigmoid(xl + xg) == 1 / (1 + exp(z)); exp sits on the otherwise-idle EUP.
    wei = 1.0 / (1.0 + jnp.exp(z))

    # out = 2*x*wei + 2*res*(1-wei) == 2*(res + wei*(x - res))
    o_ref[0] = (2.0 * (res + wei * (x - res))).astype(o_ref.dtype)


def pack_params(params, *, mxu_dtype=jnp.bfloat16):
    """Fold BN scales + conv biases, stack the two branches, pack for the MXU.

    Input: 4 tuples of (w (cin,cout), scale (1,cout), bias (1,cout)) for
    [local conv1, local conv2, global conv1, global conv2].
    Output:
      wa (2Cr, C)  bf16 — stacked, scale-folded first-layer weights
      ba (2Cr, 1)  f32  — stacked first-layer biases
      wb (C, 2Cr)  bf16 — stacked, scale-folded, NEGATED second-layer weights
      bb (C, 1)    f32  — NEGATED summed second-layer biases  -(b2 + b4)
    The negation lets the kernel compute sigmoid(xl+xg) as 1/(1+exp(z)).
    """
    (w1, s1, b1), (w2, s2, b2), (w3, s3, b3), (w4, s4, b4) = params
    C, Cr = w1.shape
    wa = jnp.concatenate([(w1 * s1).T, (w3 * s3).T], axis=0).astype(mxu_dtype)
    ba = jnp.concatenate([b1.reshape(Cr, 1), b3.reshape(Cr, 1)],
                         axis=0).astype(jnp.float32)
    wb = (-jnp.concatenate([(w2 * s2).T, (w4 * s4).T], axis=1)).astype(mxu_dtype)
    bb = (-(b2 + b4)).reshape(C, 1).astype(jnp.float32)
    return wa, ba, wb, bb


def aff_pallas(x, residual, params, *, tile_s=4096,
               vmem_budget_bytes=32 * 1024 * 1024,
               vmem_limit_bytes=48 * 1024 * 1024, out_dtype=None):
    """x, residual: (B, C, H, W), any float dtype (bf16 recommended — the
    kernel is HBM-bandwidth-bound).  Returns (B, C, H, W) in out_dtype
    (defaults to x.dtype)."""
    B, C, H, W = x.shape
    S = H * W
    io_dtype = x.dtype
    out_dtype = io_dtype if out_dtype is None else out_dtype
    io_b = jnp.dtype(io_dtype).itemsize
    out_b = jnp.dtype(out_dtype).itemsize

    wa, ba, wb, bb = pack_params(params)
    Cr2 = wa.shape[0]                          # 2 * inter_channels

    # --- spatial tile sizing -------------------------------------------------
    # Per lane-column: double-buffered pipelined blocks (x, res, out) plus the
    # in-kernel f32/bf16 temporaries (x, res upcasts, xa, h, z/wei).
    col_pipe = 2 * (2 * C * io_b + C * out_b)
    col_tmp = (3 * C + 2 * Cr2) * 4 + (C + Cr2) * 2
    max_ts = max(128, (vmem_budget_bytes // (col_pipe + col_tmp)) // 128 * 128)
    ts = min(tile_s, max_ts)
    if ts >= S:
        ts = S                                 # single full-extent tile
    else:
        ts = max(128, (ts // 128) * 128)       # lane-dense multiple of 128
    # v7x: guarantee >= 2 parallel grid steps so both TensorCores get work.
    if B * pl.cdiv(S, ts) < 2 and S >= 2 * 128:
        ts = max(128, ((S // 2) // 128) * 128)
    n_tiles = pl.cdiv(S, ts)                   # ragged tail = partial block

    # Native NCHW: (B, C, H, W) -> (B, C, S) is a free reshape (no transpose),
    # and no host-side pad/slice copies.
    x3 = x.reshape(B, C, S)
    r3 = residual.reshape(B, C, S)

    row_spec = pl.BlockSpec((1, C, ts), lambda b, i: (b, 0, i))
    full = lambda shape: pl.BlockSpec(shape, lambda b, i: (0, 0))

    w_bytes = int(wa.size) * 2 + int(wb.size) * 2 + int(ba.size) * 4 + int(bb.size) * 4
    cost = pl.CostEstimate(
        flops=int(4 * B * S * C * Cr2 + 8 * B * S * C),
        transcendentals=int(B * S * C),
        bytes_accessed=int(B * C * S * (2 * io_b + out_b)) + w_bytes,
    )

    out3 = pl.pallas_call(
        _aff_kernel,
        out_shape=jax.ShapeDtypeStruct((B, C, S), out_dtype),
        grid_spec=pltpu.PrefetchScalarGridSpec(
            num_scalar_prefetch=0,
            grid=(B, n_tiles),
            in_specs=[
                row_spec, row_spec,              # x, residual tiles
                full((Cr2, C)), full((Cr2, 1)),  # fused layer-1 weights / bias
                full((C, Cr2)), full((C, 1)),    # fused layer-2 weights / bias
            ],
            out_specs=row_spec,
        ),
        compiler_params=pltpu.CompilerParams(
            dimension_semantics=("parallel", "parallel"),
            vmem_limit_bytes=vmem_limit_bytes),
        cost_estimate=cost,
    )(x3, r3, wa, ba, wb, bb)

    return out3.reshape(B, C, H, W)


def make_params(key, channels, r):
    """Deterministic init matching the PyTorch module:
       conv weights: kaiming_normal_(mode='fan_out', nonlinearity='relu')
       conv bias:    default uniform(-1/sqrt(fan_in), 1/sqrt(fan_in))
       BN: gamma=1, beta=0, running_mean=0, running_var=1 (eval mode),
       expressed as per-channel (scale, bias) to be folded with the conv."""
    inter = int(channels // r)
    eps = 1e-5

    def conv_bn(k, cin, cout):
        kw, kb = jax.random.split(k)
        std = (2.0 / cout) ** 0.5                      # fan_out = cout * 1 * 1
        w = jax.random.normal(kw, (cin, cout), jnp.float32) * std
        bound = 1.0 / (cin ** 0.5)                     # fan_in = cin * 1 * 1
        cb = jax.random.uniform(kb, (cout,), jnp.float32, -bound, bound)
        gamma, beta = jnp.ones((cout,)), jnp.zeros((cout,))
        rm, rv = jnp.zeros((cout,)), jnp.ones((cout,))
        scale = gamma / jnp.sqrt(rv + eps)
        bias = (cb - rm) * scale + beta
        return w, scale.reshape(1, cout), bias.reshape(1, cout)

    k1, k2, k3, k4 = jax.random.split(key, 4)
    return (conv_bn(k1, channels, inter),
            conv_bn(k2, inter, channels),
            conv_bn(k3, channels, inter),
            conv_bn(k4, inter, channels))


def aff_reference(x, residual, params):
    """Pure-JAX reference with the module's forward semantics, evaluated under
    the same numerics contract as the kernel (bf16 matmul operands, f32
    accumulation, f32 epilogue).  It uses the un-packed params and an (M, C)
    layout, so it independently checks the kernel's weight packing/fusion."""
    B, C, H, W = x.shape
    f32, bf16 = jnp.float32, jnp.bfloat16
    x2 = jnp.transpose(x.astype(f32), (0, 2, 3, 1)).reshape(-1, C)
    r2 = jnp.transpose(residual.astype(f32), (0, 2, 3, 1)).reshape(-1, C)
    xa = (x2 + r2).astype(bf16)

    def branch(p_in, p_out):
        w_in, s_in, b_in = p_in
        w_out, s_out, b_out = p_out
        h = jnp.dot(xa, (w_in * s_in).astype(bf16),
                    preferred_element_type=f32) + b_in
        h = jnp.maximum(h, 0.0).astype(bf16)
        return jnp.dot(h, (w_out * s_out).astype(bf16),
                       preferred_element_type=f32) + b_out

    p1, p2, p3, p4 = params
    xl = branch(p1, p2)
    xg = branch(p3, p4)
    wei = jax.nn.sigmoid(xl + xg)
    out = 2.0 * x2 * wei + 2.0 * r2 * (1.0 - wei)
    return jnp.transpose(out.reshape(B, H, W, C), (0, 3, 1, 2))


if __name__ == "__main__":
    # Module defaults: channels=64, r=4; small spatial extent for the test.
    B, C, H, W = 2, 64, 16, 16
    key = jax.random.PRNGKey(0)
    kx, kr, kp = jax.random.split(key, 3)
    x = jax.random.normal(kx, (B, C, H, W), jnp.float32)
    residual = jax.random.normal(kr, (B, C, H, W), jnp.float32)
    params = make_params(kp, C, 4)

    # bf16 HBM I/O (the kernel is memory-bound); math stays f32 in-kernel.
    x_bf = x.astype(jnp.bfloat16)
    r_bf = residual.astype(jnp.bfloat16)

    out = aff_pallas(x_bf, r_bf, params)
    out = jax.block_until_ready(out)
    assert out.shape == (B, C, H, W)
    assert out.dtype == jnp.bfloat16

    # The reference sees the same bf16 inputs and bf16 matmul operands, so the
    # expected deviation is only the bf16 rounding of the stored output
    # (rel <= 2^-8) plus f32 accumulation-order differences.
    ref = aff_reference(x_bf, r_bf, params)
    assert jnp.allclose(out.astype(jnp.float32), ref, atol=1e-2, rtol=1e-2)
    print("KERNEL_OK")
</pallas_src>

<mosaic_0001>
module attributes {stable_mosaic.version = 11 : i64} {
  func.func @_aff_kernel(%arg0: i32, %arg1: i32, %arg2: memref<1x64x256xbf16, #tpu.memory_space<vmem>>, %arg3: memref<1x64x256xbf16, #tpu.memory_space<vmem>>, %arg4: memref<32x64xbf16, #tpu.memory_space<vmem>>, %arg5: memref<32x1xf32, #tpu.memory_space<vmem>>, %arg6: memref<64x32xbf16, #tpu.memory_space<vmem>>, %arg7: memref<64x1xf32, #tpu.memory_space<vmem>>, %arg8: memref<1x64x256xbf16, #tpu.memory_space<vmem>>) attributes {dimension_semantics = [#tpu.dimension_semantics<parallel>, #tpu.dimension_semantics<parallel>], iteration_bounds = array<i64: 2, 1>, scalar_prefetch = 0 : i64, scratch_operands = 0 : i64, tpu.core_type = #tpu.core_type<tc>, window_params = [{transform_indices = @transform_0, window_bounds = array<i64: 1, 64, 256>}, {transform_indices = @transform_1, window_bounds = array<i64: 1, 64, 256>}, {pipeline_mode = #tpu.pipeline_mode<synchronous>, transform_indices = @transform_2, window_bounds = array<i64: 32, 64>}, {pipeline_mode = #tpu.pipeline_mode<synchronous>, transform_indices = @transform_3, window_bounds = array<i64: 32, 1>}, {pipeline_mode = #tpu.pipeline_mode<synchronous>, transform_indices = @transform_4, window_bounds = array<i64: 64, 32>}, {pipeline_mode = #tpu.pipeline_mode<synchronous>, transform_indices = @transform_5, window_bounds = array<i64: 64, 1>}, {transform_indices = @transform_6, window_bounds = array<i64: 1, 64, 256>}]} {
    %c0 = arith.constant 0 : index
    %c0_0 = arith.constant 0 : index
    %c0_1 = arith.constant 0 : index
    %0 = vector.load %arg2[%c0, %c0_0, %c0_1] : memref<1x64x256xbf16, #tpu.memory_space<vmem>>, vector<1x64x256xbf16>
    %1 = vector.shape_cast %0 : vector<1x64x256xbf16> to vector<64x256xbf16>
    %2 = arith.extf %1 : vector<64x256xbf16> to vector<64x256xf32>
    %c0_2 = arith.constant 0 : index
    %c0_3 = arith.constant 0 : index
    %c0_4 = arith.constant 0 : index
    %3 = vector.load %arg3[%c0_2, %c0_3, %c0_4] : memref<1x64x256xbf16, #tpu.memory_space<vmem>>, vector<1x64x256xbf16>
    %4 = vector.shape_cast %3 : vector<1x64x256xbf16> to vector<64x256xbf16>
    %5 = arith.extf %4 : vector<64x256xbf16> to vector<64x256xf32>
    %6 = arith.addf %2, %5 : vector<64x256xf32>
    %7 = arith.truncf %6 : vector<64x256xf32> to vector<64x256xbf16>
    %c0_5 = arith.constant 0 : index
    %c0_6 = arith.constant 0 : index
    %8 = vector.load %arg4[%c0_5, %c0_6] : memref<32x64xbf16, #tpu.memory_space<vmem>>, vector<32x64xbf16>
    %cst = arith.constant dense<0.000000e+00> : vector<32x256xf32>
    %9 = tpu.matmul %8, %7, %cst {dimension_numbers = #tpu.dot_dimension_numbers<[1], [0], [0], [1], [0, 0, 1, 1], [], []>} : vector<32x64xbf16>, vector<64x256xbf16>, vector<32x256xf32> -> vector<32x256xf32>
    %c0_7 = arith.constant 0 : index
    %c0_8 = arith.constant 0 : index
    %10 = vector.load %arg5[%c0_7, %c0_8] : memref<32x1xf32, #tpu.memory_space<vmem>>, vector<32x1xf32>
    %11 = vector.broadcast %10 : vector<32x1xf32> to vector<32x256xf32>
    %12 = arith.addf %9, %11 : vector<32x256xf32>
    %cst_9 = arith.constant 0.000000e+00 : f32
    %13 = vector.broadcast %cst_9 : f32 to vector<32x256xf32>
    %14 = arith.maximumf %12, %13 : vector<32x256xf32>
    %15 = arith.truncf %14 : vector<32x256xf32> to vector<32x256xbf16>
    %c0_10 = arith.constant 0 : index
    %c0_11 = arith.constant 0 : index
    %16 = vector.load %arg6[%c0_10, %c0_11] : memref<64x32xbf16, #tpu.memory_space<vmem>>, vector<64x32xbf16>
    %cst_12 = arith.constant dense<0.000000e+00> : vector<64x256xf32>
    %17 = tpu.matmul %16, %15, %cst_12 {dimension_numbers = #tpu.dot_dimension_numbers<[1], [0], [0], [1], [0, 0, 1, 1], [], []>} : vector<64x32xbf16>, vector<32x256xbf16>, vector<64x256xf32> -> vector<64x256xf32>
    %c0_13 = arith.constant 0 : index
    %c0_14 = arith.constant 0 : index
    %18 = vector.load %arg7[%c0_13, %c0_14] : memref<64x1xf32, #tpu.memory_space<vmem>>, vector<64x1xf32>
    %19 = vector.broadcast %18 : vector<64x1xf32> to vector<64x256xf32>
    %20 = arith.addf %17, %19 : vector<64x256xf32>
    %21 = math.exp %20 : vector<64x256xf32>
    %cst_15 = arith.constant 1.000000e+00 : f32
    %22 = vector.broadcast %cst_15 : f32 to vector<64x256xf32>
    %23 = arith.addf %22, %21 : vector<64x256xf32>
    %cst_16 = arith.constant 1.000000e+00 : f32
    %24 = vector.broadcast %cst_16 : f32 to vector<64x256xf32>
    %25 = arith.divf %24, %23 : vector<64x256xf32>
    %26 = arith.subf %2, %5 : vector<64x256xf32>
    %27 = arith.mulf %25, %26 : vector<64x256xf32>
    %28 = arith.addf %5, %27 : vector<64x256xf32>
    %cst_17 = arith.constant 2.000000e+00 : f32
    %29 = vector.broadcast %cst_17 : f32 to vector<64x256xf32>
    %30 = arith.mulf %29, %28 : vector<64x256xf32>
    %31 = arith.truncf %30 : vector<64x256xf32> to vector<64x256xbf16>
    %c0_18 = arith.constant 0 : index
    %c0_19 = arith.constant 0 : index
    %c0_20 = arith.constant 0 : index
    %32 = vector.load %arg8[%c0_18, %c0_19, %c0_20] : memref<1x64x256xbf16, #tpu.memory_space<vmem>>, vector<1x64x256xbf16>
    %33 = vector.shape_cast %32 : vector<1x64x256xbf16> to vector<64x256xbf16>
    %34 = vector.shape_cast %31 : vector<64x256xbf16> to vector<1x64x256xbf16>
    tpu.vector_store %arg8[%c0_18, %c0_19, %c0_20], %34 {strides = array<i32>} : memref<1x64x256xbf16, #tpu.memory_space<vmem>>, vector<1x64x256xbf16>,
    return
  }
  func.func @transform_0(%arg0: i32, %arg1: i32) -> (i32, i32, i32) {
    %c0_i32 = arith.constant 0 : i32
    %c0_i32_0 = arith.constant 0 : i32
    return %arg0, %c0_i32, %arg1 : i32, i32, i32
  }
  func.func @transform_1(%arg0: i32, %arg1: i32) -> (i32, i32, i32) {
    %c0_i32 = arith.constant 0 : i32
    %c0_i32_0 = arith.constant 0 : i32
    return %arg0, %c0_i32, %arg1 : i32, i32, i32
  }
  func.func @transform_2(%arg0: i32, %arg1: i32) -> (i32, i32) {
    %c0_i32 = arith.constant 0 : i32
    %c0_i32_0 = arith.constant 0 : i32
    %c0_i32_1 = arith.constant 0 : i32
    return %c0_i32, %c0_i32_0 : i32, i32
  }
  func.func @transform_3(%arg0: i32, %arg1: i32) -> (i32, i32) {
    %c0_i32 = arith.constant 0 : i32
    %c0_i32_0 = arith.constant 0 : i32
    %c0_i32_1 = arith.constant 0 : i32
    return %c0_i32, %c0_i32_0 : i32, i32
  }
  func.func @transform_4(%arg0: i32, %arg1: i32) -> (i32, i32) {
    %c0_i32 = arith.constant 0 : i32
    %c0_i32_0 = arith.constant 0 : i32
    %c0_i32_1 = arith.constant 0 : i32
    return %c0_i32, %c0_i32_0 : i32, i32
  }
  func.func @transform_5(%arg0: i32, %arg1: i32) -> (i32, i32) {
    %c0_i32 = arith.constant 0 : i32
    %c0_i32_0 = arith.constant 0 : i32
    %c0_i32_1 = arith.constant 0 : i32
    return %c0_i32, %c0_i32_0 : i32, i32
  }
  func.func @transform_6(%arg0: i32, %arg1: i32) -> (i32, i32, i32) {
    %c0_i32 = arith.constant 0 : i32
    %c0_i32_0 = arith.constant 0 : i32
    return %arg0, %c0_i32, %arg1 : i32, i32, i32
  }
}

</mosaic_0001>

<llo_original>
// kernel: tpu_custom_call.1
$region0: #{tpu_custom_call.1}
  #allocation0 [shape = 'u32[]', space=smem, size = 0x4, offset = 0x4, fixed_abs, tag = 'smem constant byte address 0x4 - core index']
  #allocation1 [shape = 'u32[144,128]{1,0:T(1,128)}', space=vmem, size = 0x12000, scoped, tag = 'internal scratch']
  %s0 = inlined_call_operand.vmem [shape: bf16[2,64,256], index: 0, kind: input, shape index: {}]
  %s1 = inlined_call_operand.hbm [shape: bf16[2,64,256], index: 1, kind: input, shape index: {}]
  %s2 = inlined_call_operand.hbm [shape: bf16[32,64], index: 2, kind: input, shape index: {}]
  %s3 = inlined_call_operand.vmem [shape: f32[32,1], index: 3, kind: input, shape index: {}]
  %s4 = inlined_call_operand.vmem [shape: bf16[64,32], index: 4, kind: input, shape index: {}]
  %s5 = inlined_call_operand.vmem [shape: f32[64,1], index: 5, kind: input, shape index: {}]
  %s6 = inlined_call_operand.hbm [shape: bf16[2,64,256], index: 6, kind: output, shape index: {}]
  %s7 = sld [smem:[#allocation0]]
  $region65: #{tpu_custom_call.1} parent=0
    _
  %s9 = ssub.s32 1, %s7
  %s10 = scalar_select 0, %s9, %s7
  $region1: #{tpu_custom_call.1} parent=0
    #allocation2 [shape = 'u8[65536]{0}', space=vmem, size = 0x10000, scoped, tag = 'input window, operand 1']
    #allocation3 [shape = 's32[2]{0}', space=sflag, size = 0x8, scoped, tag = 'scoped memory for tpu_custom_call.1']
    #allocation4 [shape = 's32[2]{0}', space=sflag, size = 0x8, scoped, tag = 'scoped memory for tpu_custom_call.1']
    #allocation5 [shape = 'u8[8192]{0}', space=vmem, size = 0x2000, scoped, tag = 'input window, operand 2, single buffered']
    #allocation6 [shape = 's32[1]{0}', space=sflag, size = 0x4, scoped, tag = 'scoped memory for tpu_custom_call.1']
    #allocation7 [shape = 'u8[65536]{0}', space=vmem, size = 0x10000, scoped, tag = 'output window, operand 0']
    %11 = vsyncpa [#allocation3], 0
    %s12 = scalar_lea.sflag [#allocation3], 1
    %13 = vsyncpa %s12, 0
    %14 = vsyncpa [#allocation6], 0
    %15 = vsyncpa [#allocation4], 0
    %s16 = scalar_lea.sflag [#allocation4], 1
    %17 = vsyncpa %s16, 0
    loop: start=0, step=1, limit=4
    $region2: #{tpu_custom_call.1} parent=1 // loop_pre_header
      _
    $region3: #{tpu_custom_call.1} parent=1 // loop_header
      %s19 = sphi 0, %s23
      %p20 = scmp.ge.s32.totalorder %s19, 4
      %s26 = sphi 0, %s38
      %s27 = sphi 0, %s34
      %s28 = sphi 0, %s26
      %s29 = sphi 0, %s27
      %s30 = sphi 0, %s28
      %s31 = sphi 0, %s29
      %s43 = sphi 0, %s45
      %s46 = sphi 0, %s43
      %s47 = sphi 0, %s46
      %s63 = sphi 0, %s47
      %s71 = sphi 0, %s73
      %s74 = sphi 0, %s71
      %s75 = sphi 0, %s74
      %s91 = sphi 0, %s75
      %s95 = sphi 0, %s95
      %s97 = sphi 0, %s95
      %s98 = sphi 0, %s97
      %s112 = sphi 0, %s98
      %s116 = sphi 0, %s116
      %s118 = sphi 0, %s116
      %s119 = sphi 0, %s118
      %s133 = sphi 0, %s119
      %s137 = sphi 0, %s137
      %s139 = sphi 0, %s137
      %s140 = sphi 0, %s139
      %s154 = sphi 0, %s140
      %s158 = sphi 0, %s158
      %s160 = sphi 0, %s158
      %s161 = sphi 0, %s160
      %s175 = sphi 0, %s161
      %s183 = sphi 0, %s185
      %s186 = sphi 0, %s183
      %s187 = sphi 0, %s186
      %s203 = sphi 0, %s187
    $region4: #{tpu_custom_call.1} parent=1 // loop_header_branch
      %22 = sbr.rel (%p20) target = $region8
    $region5: #{tpu_custom_call.1} parent=1 // loop_body
      %s24 = ssub.s32 %s19, 1
      %s25 = ssub.s32 %s19, 2
      %s32 = sadd.s32 1, %s27
      %p33 = scmp.ge.s32.totalorder %s32, 1
      %s34 = scalar_select %p33, 0, %s32
      %s35 = sadd.s32 1, %s26
      %s36 = scalar_select %p33, %s35, %s26
      %p37 = scmp.ge.s32.totalorder %s36, 2
      %s38 = scalar_select %p37, 0, %s36
      %s39 = ssub.s32 %s26, %s38
      %s40 = ssub.s32 %s27, %s34
      %s41 = sor.u32 %s39, %s40
      %p42 = scmp.eq.s32.totalorder %s41, 0
      %s44 = sadd.s32 %s43, 1
      %s45 = scalar_select %p42, %s43, %s44
      %p48 = pneg %p42
      %p49 = scmp.eq.s32.totalorder %s19, 1
      %p50 = por %p48, %p49
      %p51 = scmp.ne.s32.totalorder %s43, %s46
      %p52 = scmp.eq.s32.totalorder %s19, 0
      %p53 = por %p51, %p52
      %p54 = scmp.ne.s32.totalorder %s43, %s46
      %p55 = scmp.eq.s32.totalorder %s24, 1
      %p56 = por %p54, %p55
      %p57 = scmp.ne.s32.totalorder %s46, %s47
      %p58 = scmp.eq.s32.totalorder %s24, 0
      %p59 = por %p57, %p58
      %p60 = scmp.ne.s32.totalorder %s46, %s47
      %p61 = scmp.eq.s32.totalorder %s25, 1
      %p62 = por %p60, %p61
      %p64 = scmp.ne.s32.totalorder %s47, %s63
      %p65 = scmp.eq.s32.totalorder %s25, 0
      %p66 = por %p64, %p65
      %s67 = ssub.s32 %s26, %s38
      %s68 = ssub.s32 %s27, %s34
      %s69 = sor.u32 %s67, %s68
      %p70 = scmp.eq.s32.totalorder %s69, 0
      %s72 = sadd.s32 %s71, 1
      %s73 = scalar_select %p70, %s71, %s72
      %p76 = pneg %p70
      %p77 = scmp.eq.s32.totalorder %s19, 1
      %p78 = por %p76, %p77
      %p79 = scmp.ne.s32.totalorder %s71, %s74
      %p80 = scmp.eq.s32.totalorder %s19, 0
      %p81 = por %p79, %p80
      %p82 = scmp.ne.s32.totalorder %s71, %s74
      %p83 = scmp.eq.s32.totalorder %s24, 1
      %p84 = por %p82, %p83
      %p85 = scmp.ne.s32.totalorder %s74, %s75
      %p86 = scmp.eq.s32.totalorder %s24, 0
      %p87 = por %p85, %p86
      %p88 = scmp.ne.s32.totalorder %s74, %s75
      %p89 = scmp.eq.s32.totalorder %s25, 1
      %p90 = por %p88, %p89
      %p92 = scmp.ne.s32.totalorder %s75, %s91
      %p93 = scmp.eq.s32.totalorder %s25, 0
      %p94 = por %p92, %p93
      %s96 = sadd.s32 %s95, 1
      %p99 = scmp.eq.s32.totalorder %s19, 1
      %p100 = scmp.ne.s32.totalorder %s95, %s97
      %p101 = scmp.eq.s32.totalorder %s19, 0
      %p102 = por %p100, %p101
      %p103 = scmp.ne.s32.totalorder %s95, %s97
      %p104 = scmp.eq.s32.totalorder %s24, 1
      %p105 = por %p103, %p104
      %p106 = scmp.ne.s32.totalorder %s97, %s98
      %p107 = scmp.eq.s32.totalorder %s24, 0
      %p108 = por %p106, %p107
      %p109 = scmp.ne.s32.totalorder %s97, %s98
      %p110 = scmp.eq.s32.totalorder %s25, 1
      %p111 = por %p109, %p110
      %p113 = scmp.ne.s32.totalorder %s98, %s112
      %p114 = scmp.eq.s32.totalorder %s25, 0
      %p115 = por %p113, %p114
      %s117 = sadd.s32 %s116, 1
      %p120 = scmp.eq.s32.totalorder %s19, 1
      %p121 = scmp.ne.s32.totalorder %s116, %s118
      %p122 = scmp.eq.s32.totalorder %s19, 0
      %p123 = por %p121, %p122
      %p124 = scmp.ne.s32.totalorder %s116, %s118
      %p125 = scmp.eq.s32.totalorder %s24, 1
      %p126 = por %p124, %p125
      %p127 = scmp.ne.s32.totalorder %s118, %s119
      %p128 = scmp.eq.s32.totalorder %s24, 0
      %p129 = por %p127, %p128
      %p130 = scmp.ne.s32.totalorder %s118, %s119
      %p131 = scmp.eq.s32.totalorder %s25, 1
      %p132 = por %p130, %p131
      %p134 = scmp.ne.s32.totalorder %s119, %s133
      %p135 = scmp.eq.s32.totalorder %s25, 0
      %p136 = por %p134, %p135
      %s138 = sadd.s32 %s137, 1
      %p141 = scmp.eq.s32.totalorder %s19, 1
      %p142 = scmp.ne.s32.totalorder %s137, %s139
      %p143 = scmp.eq.s32.totalorder %s19, 0
      %p144 = por %p142, %p143
      %p145 = scmp.ne.s32.totalorder %s137, %s139
      %p146 = scmp.eq.s32.totalorder %s24, 1
      %p147 = por %p145, %p146
      %p148 = scmp.ne.s32.totalorder %s139, %s140
      %p149 = scmp.eq.s32.totalorder %s24, 0
      %p150 = por %p148, %p149
      %p151 = scmp.ne.s32.totalorder %s139, %s140
      %p152 = scmp.eq.s32.totalorder %s25, 1
      %p153 = por %p151, %p152
      %p155 = scmp.ne.s32.totalorder %s140, %s154
      %p156 = scmp.eq.s32.totalorder %s25, 0
      %p157 = por %p155, %p156
      %s159 = sadd.s32 %s158, 1
      %p162 = scmp.eq.s32.totalorder %s19, 1
      %p163 = scmp.ne.s32.totalorder %s158, %s160
      %p164 = scmp.eq.s32.totalorder %s19, 0
      %p165 = por %p163, %p164
      %p166 = scmp.ne.s32.totalorder %s158, %s160
      %p167 = scmp.eq.s32.totalorder %s24, 1
      %p168 = por %p166, %p167
      %p169 = scmp.ne.s32.totalorder %s160, %s161
      %p170 = scmp.eq.s32.totalorder %s24, 0
      %p171 = por %p169, %p170
      %p172 = scmp.ne.s32.totalorder %s160, %s161
      %p173 = scmp.eq.s32.totalorder %s25, 1
      %p174 = por %p172, %p173
      %p176 = scmp.ne.s32.totalorder %s161, %s175
      %p177 = scmp.eq.s32.totalorder %s25, 0
      %p178 = por %p176, %p177
      %s179 = ssub.s32 %s26, %s38
      %s180 = ssub.s32 %s27, %s34
      %s181 = sor.u32 %s179, %s180
      %p182 = scmp.eq.s32.totalorder %s181, 0
      %s184 = sadd.s32 %s183, 1
      %s185 = scalar_select %p182, %s183, %s184
      %p188 = pneg %p182
      %p189 = scmp.eq.s32.totalorder %s19, 1
      %p190 = por %p188, %p189
      %p191 = scmp.ne.s32.totalorder %s183, %s186
      %p192 = scmp.eq.s32.totalorder %s19, 0
      %p193 = por %p191, %p192
      %p194 = scmp.ne.s32.totalorder %s183, %s186
      %p195 = scmp.eq.s32.totalorder %s24, 1
      %p196 = por %p194, %p195
      %p197 = scmp.ne.s32.totalorder %s186, %s187
      %p198 = scmp.eq.s32.totalorder %s24, 0
      %p199 = por %p197, %p198
      %p200 = scmp.ne.s32.totalorder %s186, %s187
      %p201 = scmp.eq.s32.totalorder %s25, 1
      %p202 = por %p200, %p201
      %p204 = scmp.ne.s32.totalorder %s187, %s203
      %p205 = scmp.eq.s32.totalorder %s25, 0
      %p206 = por %p204, %p205
      %p207 = scmp.le.s32.totalorder 1, %s19
      %p208 = scmp.lt.s32.totalorder %s19, 3
      %p209 = pnand %p207, %p208
      %p210 = pneg %p209
      // Predicated region
      $region9: #{tpu_custom_call.1} parent=5 // pred_check
        _
      $region10: #{tpu_custom_call.1} parent=5 // pred_check_branch
        %212 = sbr.rel (%p209) target = $region12
      $region11: #{tpu_custom_call.1} parent=5 // pred_region
        %s213 = ssub.s32 %s19, 1
        // Predicated region
        $region13: #{tpu_custom_call.1} parent=11 // pred_check
          %p214 = pneg %p108
        $region14: #{tpu_custom_call.1} parent=11 // pred_check_branch
          %216 = sbr.rel (%p214) target = $region16
        $region15: #{tpu_custom_call.1} parent=11 // pred_region
          %s218 = ssub.s32 256, 256
          %219 = vsyncadd [#allocation6], %s218
          %s220 = sshll.u32 [#allocation5], 4
          %s221 = int_to_ptr.vmem [resolvable:$true] %s220
          %226 = dma.hbm_to_vmem [thread:$0]  %s2, 256, %s221, [#allocation6], 64, 64, 4
        $region16: #{tpu_custom_call.1} parent=11 // pred_fallthru
          _
        // Predicated region
        $region17: #{tpu_custom_call.1} parent=11 // pred_check
          %p227 = pneg %p129
        $region18: #{tpu_custom_call.1} parent=11 // pred_check_branch
          %229 = sbr.rel (%p227) target = $region20
        $region19: #{tpu_custom_call.1} parent=11 // pred_region
          _
        $region20: #{tpu_custom_call.1} parent=11 // pred_fallthru
          _
        // Predicated region
        $region21: #{tpu_custom_call.1} parent=11 // pred_check
          %p230 = pneg %p150
        $region22: #{tpu_custom_call.1} parent=11 // pred_check_branch
          %232 = sbr.rel (%p230) target = $region24
        $region23: #{tpu_custom_call.1} parent=11 // pred_region
          _
        $region24: #{tpu_custom_call.1} parent=11 // pred_fallthru
          _
        // Predicated region
        $region25: #{tpu_custom_call.1} parent=11 // pred_check
          %p233 = pneg %p171
        $region26: #{tpu_custom_call.1} parent=11 // pred_check_branch
          %235 = sbr.rel (%p233) target = $region28
        $region27: #{tpu_custom_call.1} parent=11 // pred_region
          _
        $region28: #{tpu_custom_call.1} parent=11 // pred_fallthru
          _
      $region12: #{tpu_custom_call.1} parent=5 // pred_fallthru
        _
      %p236 = scmp.lt.s32.totalorder %s19, 2
      // Predicated region
      $region29: #{tpu_custom_call.1} parent=5 // pred_check
        %p237 = pneg %p236
      $region30: #{tpu_custom_call.1} parent=5 // pred_check_branch
        %239 = sbr.rel (%p237) target = $region32
      $region31: #{tpu_custom_call.1} parent=5 // pred_region
        // Predicated region
        $region33: #{tpu_custom_call.1} parent=31 // pred_check
          %p240 = pneg %p53
        $region34: #{tpu_custom_call.1} parent=31 // pred_check_branch
          %242 = sbr.rel (%p240) target = $region36
        $region35: #{tpu_custom_call.1} parent=31 // pred_region
          %s243 = smul.u32 2, %s27
          %p244 = scmp.lt.s32.totalorder %s26, 1
          %s245 = scalar_select %p244, %s26, 1
          %p246 = scmp.lt.s32.totalorder %s243, 1
          %s247 = scalar_select %p246, %s243, 1
          %s248 = smul.addr %s245, 16
          %s249 = sadd.s32 %s247, %s248
          %s250 = smul.addr %s249, 4
          %s251 = scalar_lea.vmem %s0, %s250
          %s252 = smul.u32 2, %s27
        $region36: #{tpu_custom_call.1} parent=31 // pred_fallthru
          _
        // Predicated region
        $region37: #{tpu_custom_call.1} parent=31 // pred_check
          %p253 = pneg %p81
        $region38: #{tpu_custom_call.1} parent=31 // pred_check_branch
          %255 = sbr.rel (%p253) target = $region40
        $region39: #{tpu_custom_call.1} parent=31 // pred_region
          %s256 = sand.u32 %s71, 1
          %s257 = scalar_lea.sflag [#allocation3], %s256
          %s258 = sand.u32 %s71, 1
          %s259 = smul.addr %s258, 64
          %s260 = scalar_lea.vmem [#allocation2], %s259
          %s261 = smul.u32 2, %s27
          %s263 = ssub.s32 1024, 1024
          %264 = vsyncadd %s257, %s263
          %s265 = smul.addr %s26, 16
          %s266 = sadd.s32 %s261, %s265
          %s267 = smul.addr %s266, 64
          %s268 = scalar_lea.hbm %s1, %s267
          %s269 = sshll.u32 %s260, 4
          %s270 = int_to_ptr.vmem [resolvable:$true] %s269
          %275 = dma.hbm_to_vmem [thread:$0]  %s268, 1024, %s270, %s257, 128, 128, 8
        $region40: #{tpu_custom_call.1} parent=31 // pred_fallthru
          _
      $region32: #{tpu_custom_call.1} parent=5 // pred_fallthru
        _
      %p276 = scmp.le.s32.totalorder 1, %s19
      %p277 = scmp.lt.s32.totalorder %s19, 3
      %p278 = pnand %p276, %p277
      %p279 = pneg %p278
      // Predicated region
      $region41: #{tpu_custom_call.1} parent=5 // pred_check
        _
      $region42: #{tpu_custom_call.1} parent=5 // pred_check_branch
        %281 = sbr.rel (%p278) target = $region44
      $region43: #{tpu_custom_call.1} parent=5 // pred_region
        %s282 = ssub.s32 %s19, 1
        %s283 = sand.u32 %s74, 1
        %s284 = scalar_lea.sflag [#allocation3], %s283
        %s285 = sand.u32 %s74, 1
        %s286 = smul.addr %s285, 64
        %s287 = scalar_lea.vmem [#allocation2], %s286
        // Predicated region
        $region45: #{tpu_custom_call.1} parent=43 // pred_check
          %p288 = pneg %p87
        $region46: #{tpu_custom_call.1} parent=43 // pred_check_branch
          %290 = sbr.rel (%p288) target = $region48
        $region47: #{tpu_custom_call.1} parent=43 // pred_region
          %291 = dma.done %s284, 1024
        $region48: #{tpu_custom_call.1} parent=43 // pred_fallthru
          _
        // Predicated region
        $region49: #{tpu_custom_call.1} parent=43 // pred_check
          %p292 = pneg %p108
        $region50: #{tpu_custom_call.1} parent=43 // pred_check_branch
          %294 = sbr.rel (%p292) target = $region52
        $region51: #{tpu_custom_call.1} parent=43 // pred_region
          %295 = dma.done [#allocation6], 256
        $region52: #{tpu_custom_call.1} parent=43 // pred_fallthru
          _
        %s296 = smul.u32 2, %s29
        %p297 = scmp.lt.s32.totalorder %s28, 1
        %s298 = scalar_select %p297, %s28, 1
        %p299 = scmp.lt.s32.totalorder %s296, 1
        %s300 = scalar_select %p299, %s296, 1
        %s301 = smul.addr %s298, 16
        %s302 = sadd.s32 %s300, %s301
        %s303 = smul.addr %s302, 4
        %s304 = scalar_lea.vmem %s0, %s303
        %p305 = pneg %p59
        %p306 = pneg %p56
        %s307 = sand.u32 %s74, 1
        %s308 = scalar_lea.sflag [#allocation3], %s307
        %s309 = sand.u32 %s74, 1
        %s310 = smul.addr %s309, 64
        %s311 = scalar_lea.vmem [#allocation2], %s310
        %p312 = pneg %p87
        %p313 = pneg %p84
        %p314 = pneg %p108
        %p315 = pneg %p105
        %p316 = pneg %p129
        %p317 = pneg %p126
        %p318 = pneg %p150
        %p319 = pneg %p147
        %p320 = pneg %p171
        %p321 = pneg %p168
        %p322 = pneg %p199
        %p323 = pneg %p196
        %s324 = sand.u32 %s186, 1
        %s325 = scalar_lea.sflag [#allocation4], %s324
        %s326 = sand.u32 %s186, 1
        %s327 = smul.addr %s326, 64
        %s328 = scalar_lea.vmem [#allocation7], %s327
        %s329 = smul.u32 2, %s29
        %p330 = scmp.lt.s32.totalorder %s28, 1
        %s331 = scalar_select %p330, %s28, 1
        %p332 = scmp.lt.s32.totalorder %s329, 1
        %s333 = scalar_select %p332, %s329, 1
        %s334 = smul.addr %s331, 16
        %s335 = sadd.s32 %s333, %s334
        %s336 = smul.addr %s335, 4
        %s337 = scalar_lea.vmem %s0, %s336
        %s338 = smul.u32 2, %s29
        %s339 = smul.u32 2, %s29
        %s340 = smul.u32 2, %s29
        %v342 = vld [vmem:[%s337] sm:$0xff]
        %v343 = vld [vmem:[%s337 + $0x8] sm:$0xff]
        %v344 = vld [vmem:[%s337 + $0x10] sm:$0xff]
        %v345 = vld [vmem:[%s337 + $0x18] sm:$0xff]
        %v346 = vld [vmem:[%s337 + $0x20] sm:$0xff]
        %v347 = vld [vmem:[%s337 + $0x28] sm:$0xff]
        %v348 = vld [vmem:[%s337 + $0x30] sm:$0xff]
        %v349 = vld [vmem:[%s337 + $0x38] sm:$0xff]
        %v350 = vunpack.c.l.bf16 %v342
        %v351 = vunpack.c.h.bf16 %v342
        %v352 = vunpack.c.l.bf16 %v343
        %v353 = vunpack.c.h.bf16 %v343
        %v354 = vunpack.c.l.bf16 %v344
        %v355 = vunpack.c.h.bf16 %v344
        %v356 = vunpack.c.l.bf16 %v345
        %v357 = vunpack.c.h.bf16 %v345
        %v358 = vunpack.c.l.bf16 %v346
        %v359 = vunpack.c.h.bf16 %v346
        %v360 = vunpack.c.l.bf16 %v347
        %v361 = vunpack.c.h.bf16 %v347
        %v362 = vunpack.c.l.bf16 %v348
        %v363 = vunpack.c.h.bf16 %v348
        %v364 = vunpack.c.l.bf16 %v349
        %v365 = vunpack.c.h.bf16 %v349
        %v366 = vld [vmem:[%s287] sm:$0xff]
        %v367 = vld [vmem:[%s287 + $0x8] sm:$0xff]
        %v368 = vld [vmem:[%s287 + $0x10] sm:$0xff]
        %v369 = vld [vmem:[%s287 + $0x18] sm:$0xff]
        %v370 = vld [vmem:[%s287 + $0x20] sm:$0xff]
        %v371 = vld [vmem:[%s287 + $0x28] sm:$0xff]
        %v372 = vld [vmem:[%s287 + $0x30] sm:$0xff]
        %v373 = vld [vmem:[%s287 + $0x38] sm:$0xff]
        %v374 = vunpack.c.l.bf16 %v366
        %v375 = vunpack.c.h.bf16 %v366
        %v376 = vunpack.c.l.bf16 %v367
        %v377 = vunpack.c.h.bf16 %v367
        %v378 = vunpack.c.l.bf16 %v368
        %v379 = vunpack.c.h.bf16 %v368
        %v380 = vunpack.c.l.bf16 %v369
        %v381 = vunpack.c.h.bf16 %v369
        %v382 = vunpack.c.l.bf16 %v370
        %v383 = vunpack.c.h.bf16 %v370
        %v384 = vunpack.c.l.bf16 %v371
        %v385 = vunpack.c.h.bf16 %v371
        %v386 = vunpack.c.l.bf16 %v372
        %v387 = vunpack.c.h.bf16 %v372
        %v388 = vunpack.c.l.bf16 %v373
        %v389 = vunpack.c.h.bf16 %v373
        %v390 = vadd.f32 %v350, %v374
        %v391 = vadd.f32 %v351, %v375
        %v392 = vadd.f32 %v352, %v376
        %v393 = vadd.f32 %v353, %v377
        %v394 = vadd.f32 %v354, %v378
        %v395 = vadd.f32 %v355, %v379
        %v396 = vadd.f32 %v356, %v380
        %v397 = vadd.f32 %v357, %v381
        %v398 = vadd.f32 %v358, %v382
        %v399 = vadd.f32 %v359, %v383
        %v400 = vadd.f32 %v360, %v384
        %v401 = vadd.f32 %v361, %v385
        %v402 = vadd.f32 %v362, %v386
        %v403 = vadd.f32 %v363, %v387
        %v404 = vadd.f32 %v364, %v388
        %v405 = vadd.f32 %v365, %v389
        %v406 = vpack.c.bf16 %v392, %v390
        %v407 = vpack.c.bf16 %v393, %v391
        %v408 = vpack.c.bf16 %v396, %v394
        %v409 = vpack.c.bf16 %v397, %v395
        %v410 = vpack.c.bf16 %v400, %v398
        %v411 = vpack.c.bf16 %v401, %v399
        %v412 = vpack.c.bf16 %v404, %v402
        %v413 = vpack.c.bf16 %v405, %v403
        %v414 = vld [vmem:[#allocation5] sm:$0xf]
        %v415 = vld [vmem:[#allocation5 + $0x4] sm:$0xf]
        %v416 = vld [vmem:[#allocation5 + $0x8] sm:$0xf]
        %v417 = vld [vmem:[#allocation5 + $0xc] sm:$0xf]
        %v418 = vld [vmem:[%s3] sm:$0xff]
        %v419 = vld [vmem:[%s3 + $0x8] sm:$0xff]
        %v420 = vld [vmem:[%s3 + $0x10] sm:$0xff]
        %v421 = vld [vmem:[%s3 + $0x18] sm:$0xff]
        %423 = vset.pattern.permute.xlu0 0
        %424 = vperm.xlu0 %423, %v418
        %v425 = vpop.permute.xlu0 %424
        %428 = vset.pattern.permute.xlu0 0
        %429 = vperm.xlu0 %428, %v419
        %v430 = vpop.permute.xlu0 %429
        %433 = vset.pattern.permute.xlu0 0
        %434 = vperm.xlu0 %433, %v420
        %v435 = vpop.permute.xlu0 %434
        %438 = vset.pattern.permute.xlu0 0
        %439 = vperm.xlu0 %438, %v421
        %v440 = vpop.permute.xlu0 %439
        %v446 = vunpack.c.l.b16 %v414
        %v447 = vunpack.c.l.b16 %v415
        %v448 = vunpack.c.l.b16 %v416
        %v449 = vunpack.c.l.b16 %v417
        %v450 = vpack.c.b16 %v447, %v446
        %v451 = vpack.c.b16 %v449, %v448
        %vm452 = vcmask 523264
        %v454 = vsel %vm452, %v450, 0
        %v457 = vsel %vm452, %v451, 0
        %459 = vmatprep.subr.bf16.mxu0 0
        %460 = vmatpush1.bf16.msra.mxu0 0
        %461 = vmatprep.subr.bf16.mxu0 0
        %462 = vmatpush1.bf16.msra.mxu0 0
        %463 = vmatprep.subr.bf16.mxu0 0
        %464 = vmatpush1.bf16.msra.mxu0 0
        %465 = vmatprep.subr.bf16.mxu0 0
        %466 = vmatpush1.bf16.msra.mxu0 0
        %467 = vmatprep.subr.bf16.mxu0 %v413
        %468 = vmatpush1.bf16.msra.mxu0 %v412
        %469 = vmatprep.subr.bf16.mxu0 %v411
        %470 = vmatpush1.bf16.msra.mxu0 %v410
        %471 = vmatprep.subr.bf16.mxu0 %v409
        %472 = vmatpush1.bf16.msra.mxu0 %v408
        %473 = vmatprep.subr.bf16.mxu0 %v407
        %474 = vmatpush1.bf16.msra.mxu0 %v406
        %475 = vmatprep.subr.bf16.mxu0 0
        %476 = vmatpush2.bf16.msra.mxu0 0
        %477 = vmatprep.subr.bf16.mxu0 0
        %478 = vmatpush2.bf16.msra.mxu0 0
        %479 = vmatprep.subr.bf16.mxu0 0
        %480 = vmatpush2.bf16.msra.mxu0 0
        %481 = vmatprep.subr.bf16.mxu0 0
        %482 = vmatpush2.bf16.msra.mxu0 0
        %483 = vmatprep.subr.bf16.mxu0 0
        %484 = vmatpush2.bf16.msra.mxu0 0
        %485 = vmatprep.subr.bf16.mxu0 0
        %486 = vmatpush2.bf16.msra.mxu0 0
        %487 = vmatprep.subr.bf16.mxu0 0
        %488 = vmatpush2.bf16.msra.mxu0 0
        %489 = vmatprep.subr.bf16.mxu0 0
        %490 = vmatpush2.bf16.msra.mxu0 0
        %491 = vmatprep.mubr.bf16.mxu0 0
        %492 = vmatmul.mubr.bf16.gmra.mxu0 %v454
        %v493 = vpop.f32.mrf.mxu0
        %v494 = vadd.f32 %v425, %v493
        %v495 = vpop.f32.mrf.mxu0
        %v496 = vadd.f32 %v425, %v495
        %v497 = vpop.f32.mrf.mxu0
        %v498 = vadd.f32 %v430, %v497
        %v499 = vpop.f32.mrf.mxu0
        %v500 = vadd.f32 %v430, %v499
        %501 = vmatprep.mubr.bf16.mxu0 0
        %502 = vmatmul.mubr.bf16.gmra.mxu0 %v457
        %v503 = vpop.f32.mrf.mxu0
        %v504 = vadd.f32 %v435, %v503
        %v505 = vpop.f32.mrf.mxu0
        %v506 = vadd.f32 %v435, %v505
        %v507 = vpop.f32.mrf.mxu0
        %v508 = vadd.f32 %v440, %v507
        %v509 = vpop.f32.mrf.mxu0
        %v510 = vadd.f32 %v440, %v509
        %511 = vdwg.mxu0
        %v512 = vmax.f32 %v494, 0.0
        %v513 = vmax.f32 %v496, 0.0
        %v514 = vmax.f32 %v498, 0.0
        %v515 = vmax.f32 %v500, 0.0
        %v516 = vmax.f32 %v504, 0.0
        %v517 = vmax.f32 %v506, 0.0
        %v518 = vmax.f32 %v508, 0.0
        %v519 = vmax.f32 %v510, 0.0
        %v520 = vpack.c.bf16 %v514, %v512
        %v521 = vpack.c.bf16 %v515, %v513
        %v522 = vpack.c.bf16 %v518, %v516
        %v523 = vpack.c.bf16 %v519, %v517
        %v524 = vld [vmem:[%s4] sm:$0xf]
        %v525 = vld [vmem:[%s4 + $0x4] sm:$0xf]
        %v526 = vld [vmem:[%s4 + $0x8] sm:$0xf]
        %v527 = vld [vmem:[%s4 + $0xc] sm:$0xf]
        %v528 = vld [vmem:[%s4 + $0x10] sm:$0xf]
        %v529 = vld [vmem:[%s4 + $0x14] sm:$0xf]
        %v530 = vld [vmem:[%s4 + $0x18] sm:$0xf]
        %v531 = vld [vmem:[%s4 + $0x1c] sm:$0xf]
        %v532 = vld [vmem:[%s5] sm:$0xff]
        %v533 = vld [vmem:[%s5 + $0x8] sm:$0xff]
        %v534 = vld [vmem:[%s5 + $0x10] sm:$0xff]
        %v535 = vld [vmem:[%s5 + $0x18] sm:$0xff]
        %v536 = vld [vmem:[%s5 + $0x20] sm:$0xff]
        %v537 = vld [vmem:[%s5 + $0x28] sm:$0xff]
        %v538 = vld [vmem:[%s5 + $0x30] sm:$0xff]
        %v539 = vld [vmem:[%s5 + $0x38] sm:$0xff]
        %541 = vset.pattern.permute.xlu0 0
        %542 = vperm.xlu0 %541, %v532
        %v543 = vpop.permute.xlu0 %542
        %546 = vset.pattern.permute.xlu0 0
        %547 = vperm.xlu0 %546, %v533
        %v548 = vpop.permute.xlu0 %547
        %551 = vset.pattern.permute.xlu0 0
        %552 = vperm.xlu0 %551, %v534
        %v553 = vpop.permute.xlu0 %552
        %556 = vset.pattern.permute.xlu0 0
        %557 = vperm.xlu0 %556, %v535
        %v558 = vpop.permute.xlu0 %557
        %561 = vset.pattern.permute.xlu0 0
        %562 = vperm.xlu0 %561, %v536
        %v563 = vpop.permute.xlu0 %562
        %566 = vset.pattern.permute.xlu0 0
        %567 = vperm.xlu0 %566, %v537
        %v568 = vpop.permute.xlu0 %567
        %571 = vset.pattern.permute.xlu0 0
        %572 = vperm.xlu0 %571, %v538
        %v573 = vpop.permute.xlu0 %572
        %576 = vset.pattern.permute.xlu0 0
        %577 = vperm.xlu0 %576, %v539
        %v578 = vpop.permute.xlu0 %577
        %v588 = vunpack.c.l.b16 %v524
        %v589 = vunpack.c.l.b16 %v525
        %v590 = vunpack.c.l.b16 %v526
        %v591 = vunpack.c.l.b16 %v527
        %v592 = vunpack.c.l.b16 %v528
        %v593 = vunpack.c.l.b16 %v529
        %v594 = vunpack.c.l.b16 %v530
        %v595 = vunpack.c.l.b16 %v531
        %v596 = vpack.c.b16 %v589, %v588
        %v597 = vpack.c.b16 %v591, %v590
        %v598 = vpack.c.b16 %v593, %v592
        %v599 = vpack.c.b16 %v595, %v594
        %vm600 = vcmask 261120
        %v602 = vsel %vm600, %v596, 0
        %v605 = vsel %vm600, %v597, 0
        %v608 = vsel %vm600, %v598, 0
        %v611 = vsel %vm600, %v599, 0
        %613 = vmatprep.subr.bf16.mxu0 0
        %614 = vmatpush1.bf16.msra.mxu0 0
        %615 = vmatprep.subr.bf16.mxu0 0
        %616 = vmatpush1.bf16.msra.mxu0 0
        %617 = vmatprep.subr.bf16.mxu0 0
        %618 = vmatpush1.bf16.msra.mxu0 0
        %619 = vmatprep.subr.bf16.mxu0 0
        %620 = vmatpush1.bf16.msra.mxu0 0
        %621 = vmatprep.subr.bf16.mxu0 0
        %622 = vmatpush1.bf16.msra.mxu0 0
        %623 = vmatprep.subr.bf16.mxu0 0
        %624 = vmatpush1.bf16.msra.mxu0 0
        %625 = vmatprep.subr.bf16.mxu0 %v523
        %626 = vmatpush1.bf16.msra.mxu0 %v522
        %627 = vmatprep.subr.bf16.mxu0 %v521
        %628 = vmatpush1.bf16.msra.mxu0 %v520
        %629 = vmatprep.subr.bf16.mxu0 0
        %630 = vmatpush2.bf16.msra.mxu0 0
        %631 = vmatprep.subr.bf16.mxu0 0
        %632 = vmatpush2.bf16.msra.mxu0 0
        %633 = vmatprep.subr.bf16.mxu0 0
        %634 = vmatpush2.bf16.msra.mxu0 0
        %635 = vmatprep.subr.bf16.mxu0 0
        %636 = vmatpush2.bf16.msra.mxu0 0
        %637 = vmatprep.subr.bf16.mxu0 0
        %638 = vmatpush2.bf16.msra.mxu0 0
        %639 = vmatprep.subr.bf16.mxu0 0
        %640 = vmatpush2.bf16.msra.mxu0 0
        %641 = vmatprep.subr.bf16.mxu0 0
        %642 = vmatpush2.bf16.msra.mxu0 0
        %643 = vmatprep.subr.bf16.mxu0 0
        %644 = vmatpush2.bf16.msra.mxu0 0
        %645 = vmatprep.mubr.bf16.mxu0 0
        %646 = vmatmul.mubr.bf16.gmra.mxu0 %v602
        %v647 = vpop.f32.mrf.mxu0
        %v648 = vadd.f32 %v543, %v647
        %v649 = vpop.f32.mrf.mxu0
        %v650 = vadd.f32 %v543, %v649
        %v651 = vpop.f32.mrf.mxu0
        %v652 = vadd.f32 %v548, %v651
        %v653 = vpop.f32.mrf.mxu0
        %v654 = vadd.f32 %v548, %v653
        %655 = vmatprep.mubr.bf16.mxu0 0
        %656 = vmatmul.mubr.bf16.gmra.mxu0 %v605
        %v657 = vpop.f32.mrf.mxu0
        %v658 = vadd.f32 %v553, %v657
        %v659 = vpop.f32.mrf.mxu0
        %v660 = vadd.f32 %v553, %v659
        %v661 = vpop.f32.mrf.mxu0
        %v662 = vadd.f32 %v558, %v661
        %v663 = vpop.f32.mrf.mxu0
        %v664 = vadd.f32 %v558, %v663
        %665 = vmatprep.mubr.bf16.mxu0 0
        %666 = vmatmul.mubr.bf16.gmra.mxu0 %v608
        %v667 = vpop.f32.mrf.mxu0
        %v668 = vadd.f32 %v563, %v667
        %v669 = vpop.f32.mrf.mxu0
        %v670 = vadd.f32 %v563, %v669
        %v671 = vpop.f32.mrf.mxu0
        %v672 = vadd.f32 %v568, %v671
        %v673 = vpop.f32.mrf.mxu0
        %v674 = vadd.f32 %v568, %v673
        %675 = vmatprep.mubr.bf16.mxu0 0
        %676 = vmatmul.mubr.bf16.gmra.mxu0 %v611
        %v677 = vpop.f32.mrf.mxu0
        %v678 = vadd.f32 %v573, %v677
        %v679 = vpop.f32.mrf.mxu0
        %v680 = vadd.f32 %v573, %v679
        %v681 = vpop.f32.mrf.mxu0
        %v682 = vadd.f32 %v578, %v681
        %v683 = vpop.f32.mrf.mxu0
        %v684 = vadd.f32 %v578, %v683
        %685 = vdwg.mxu0
        %v686 = vmul.f32 %v648, 1.442695
        %v687 = vpow.pop %v686
        %v688 = vmul.f32 %v650, 1.442695
        %v689 = vpow.pop %v688
        %v690 = vmul.f32 %v652, 1.442695
        %v691 = vpow.pop %v690
        %v692 = vmul.f32 %v654, 1.442695
        %v693 = vpow.pop %v692
        %v694 = vmul.f32 %v658, 1.442695
        %v695 = vpow.pop %v694
        %v696 = vmul.f32 %v660, 1.442695
        %v697 = vpow.pop %v696
        %v698 = vmul.f32 %v662, 1.442695
        %v699 = vpow.pop %v698
        %v700 = vmul.f32 %v664, 1.442695
        %v701 = vpow.pop %v700
        %v702 = vmul.f32 %v668, 1.442695
        %v703 = vpow.pop %v702
        %v704 = vmul.f32 %v670, 1.442695
        %v705 = vpow.pop %v704
        %v706 = vmul.f32 %v672, 1.442695
        %v707 = vpow.pop %v706
        %v708 = vmul.f32 %v674, 1.442695
        %v709 = vpow.pop %v708
        %v710 = vmul.f32 %v678, 1.442695
        %v711 = vpow.pop %v710
        %v712 = vmul.f32 %v680, 1.442695
        %v713 = vpow.pop %v712
        %v714 = vmul.f32 %v682, 1.442695
        %v715 = vpow.pop %v714
        %v716 = vmul.f32 %v684, 1.442695
        %v717 = vpow.pop %v716
        %v718 = vadd.f32 %v687, 1.0
        %v719 = vadd.f32 %v689, 1.0
        %v720 = vadd.f32 %v691, 1.0
        %v721 = vadd.f32 %v693, 1.0
        %v722 = vadd.f32 %v695, 1.0
        %v723 = vadd.f32 %v697, 1.0
        %v724 = vadd.f32 %v699, 1.0
        %v725 = vadd.f32 %v701, 1.0
        %v726 = vadd.f32 %v703, 1.0
        %v727 = vadd.f32 %v705, 1.0
        %v728 = vadd.f32 %v707, 1.0
        %v729 = vadd.f32 %v709, 1.0
        %v730 = vadd.f32 %v711, 1.0
        %v731 = vadd.f32 %v713, 1.0
        %v732 = vadd.f32 %v715, 1.0
        %v733 = vadd.f32 %v717, 1.0
        %v734 = vrcp.pop %v718
        %v735 = vmul.f32 1.0, %v734
        %v736 = vrcp.pop %v719
        %v737 = vmul.f32 1.0, %v736
        %v738 = vrcp.pop %v720
        %v739 = vmul.f32 1.0, %v738
        %v740 = vrcp.pop %v721
        %v741 = vmul.f32 1.0, %v740
        %v742 = vrcp.pop %v722
        %v743 = vmul.f32 1.0, %v742
        %v744 = vrcp.pop %v723
        %v745 = vmul.f32 1.0, %v744
        %v746 = vrcp.pop %v724
        %v747 = vmul.f32 1.0, %v746
        %v748 = vrcp.pop %v725
        %v749 = vmul.f32 1.0, %v748
        %v750 = vrcp.pop %v726
        %v751 = vmul.f32 1.0, %v750
        %v752 = vrcp.pop %v727
        %v753 = vmul.f32 1.0, %v752
        %v754 = vrcp.pop %v728
        %v755 = vmul.f32 1.0, %v754
        %v756 = vrcp.pop %v729
        %v757 = vmul.f32 1.0, %v756
        %v758 = vrcp.pop %v730
        %v759 = vmul.f32 1.0, %v758
        %v760 = vrcp.pop %v731
        %v761 = vmul.f32 1.0, %v760
        %v762 = vrcp.pop %v732
        %v763 = vmul.f32 1.0, %v762
        %v764 = vrcp.pop %v733
        %v765 = vmul.f32 1.0, %v764
        %v766 = vsub.f32 %v350, %v374
        %v767 = vsub.f32 %v351, %v375
        %v768 = vsub.f32 %v352, %v376
        %v769 = vsub.f32 %v353, %v377
        %v770 = vsub.f32 %v354, %v378
        %v771 = vsub.f32 %v355, %v379
        %v772 = vsub.f32 %v356, %v380
        %v773 = vsub.f32 %v357, %v381
        %v774 = vsub.f32 %v358, %v382
        %v775 = vsub.f32 %v359, %v383
        %v776 = vsub.f32 %v360, %v384
        %v777 = vsub.f32 %v361, %v385
        %v778 = vsub.f32 %v362, %v386
        %v779 = vsub.f32 %v363, %v387
        %v780 = vsub.f32 %v364, %v388
        %v781 = vsub.f32 %v365, %v389
        %v782 = vmul.f32 %v735, %v766
        %v783 = vmul.f32 %v737, %v767
        %v784 = vmul.f32 %v739, %v768
        %v785 = vmul.f32 %v741, %v769
        %v786 = vmul.f32 %v743, %v770
        %v787 = vmul.f32 %v745, %v771
        %v788 = vmul.f32 %v747, %v772
        %v789 = vmul.f32 %v749, %v773
        %v790 = vmul.f32 %v751, %v774
        %v791 = vmul.f32 %v753, %v775
        %v792 = vmul.f32 %v755, %v776
        %v793 = vmul.f32 %v757, %v777
        %v794 = vmul.f32 %v759, %v778
        %v795 = vmul.f32 %v761, %v779
        %v796 = vmul.f32 %v763, %v780
        %v797 = vmul.f32 %v765, %v781
        %v798 = vadd.f32 %v374, %v782
        %v799 = vadd.f32 %v375, %v783
        %v800 = vadd.f32 %v376, %v784
        %v801 = vadd.f32 %v377, %v785
        %v802 = vadd.f32 %v378, %v786
        %v803 = vadd.f32 %v379, %v787
        %v804 = vadd.f32 %v380, %v788
        %v805 = vadd.f32 %v381, %v789
        %v806 = vadd.f32 %v382, %v790
        %v807 = vadd.f32 %v383, %v791
        %v808 = vadd.f32 %v384, %v792
        %v809 = vadd.f32 %v385, %v793
        %v810 = vadd.f32 %v386, %v794
        %v811 = vadd.f32 %v387, %v795
        %v812 = vadd.f32 %v388, %v796
        %v813 = vadd.f32 %v389, %v797
        %v814 = vmul.f32 %v798, 2.0
        %v815 = vmul.f32 %v799, 2.0
        %v816 = vmul.f32 %v800, 2.0
        %v817 = vmul.f32 %v801, 2.0
        %v818 = vmul.f32 %v802, 2.0
        %v819 = vmul.f32 %v803, 2.0
        %v820 = vmul.f32 %v804, 2.0
        %v821 = vmul.f32 %v805, 2.0
        %v822 = vmul.f32 %v806, 2.0
        %v823 = vmul.f32 %v807, 2.0
        %v824 = vmul.f32 %v808, 2.0
        %v825 = vmul.f32 %v809, 2.0
        %v826 = vmul.f32 %v810, 2.0
        %v827 = vmul.f32 %v811, 2.0
        %v828 = vmul.f32 %v812, 2.0
        %v829 = vmul.f32 %v813, 2.0
        %v830 = vpack.c.bf16 %v816, %v814
        %v831 = vpack.c.bf16 %v817, %v815
        %v832 = vpack.c.bf16 %v820, %v818
        %v833 = vpack.c.bf16 %v821, %v819
        %v834 = vpack.c.bf16 %v824, %v822
        %v835 = vpack.c.bf16 %v825, %v823
        %v836 = vpack.c.bf16 %v828, %v826
        %v837 = vpack.c.bf16 %v829, %v827
        %v846 = vunpack.c.l.b16 %v830
        %v847 = vunpack.c.l.b16 %v831
        %v848 = vunpack.c.h.b16 %v830
        %v849 = vunpack.c.h.b16 %v831
        %v850 = vunpack.c.l.b16 %v832
        %v851 = vunpack.c.l.b16 %v833
        %v852 = vunpack.c.h.b16 %v832
        %v853 = vunpack.c.h.b16 %v833
        %v854 = vunpack.c.l.b16 %v834
        %v855 = vunpack.c.l.b16 %v835
        %v856 = vunpack.c.h.b16 %v834
        %v857 = vunpack.c.h.b16 %v835
        %v858 = vunpack.c.l.b16 %v836
        %v859 = vunpack.c.l.b16 %v837
        %v860 = vunpack.c.h.b16 %v836
        %v861 = vunpack.c.h.b16 %v837
        %v862 = vpack.c.b16 %v847, %v846
        %v863 = vpack.c.b16 %v849, %v848
        %v864 = vpack.c.b16 %v851, %v850
        %v865 = vpack.c.b16 %v853, %v852
        %v866 = vpack.c.b16 %v855, %v854
        %v867 = vpack.c.b16 %v857, %v856
        %v868 = vpack.c.b16 %v859, %v858
        %v869 = vpack.c.b16 %v861, %v860
        %878 = vst [vmem:[%s328] sm:$0xff] %v862
        %879 = vst [vmem:[%s328 + $0x8] sm:$0xff] %v863
        %880 = vst [vmem:[%s328 + $0x10] sm:$0xff] %v864
        %881 = vst [vmem:[%s328 + $0x18] sm:$0xff] %v865
        %882 = vst [vmem:[%s328 + $0x20] sm:$0xff] %v866
        %883 = vst [vmem:[%s328 + $0x28] sm:$0xff] %v867
        %884 = vst [vmem:[%s328 + $0x30] sm:$0xff] %v868
        %885 = vst [vmem:[%s328 + $0x38] sm:$0xff] %v869
        %s886 = sand.u32 %s186, 1
        %s887 = scalar_lea.sflag [#allocation4], %s886
        %s888 = sand.u32 %s186, 1
        %s889 = smul.addr %s888, 64
        %s890 = scalar_lea.vmem [#allocation7], %s889
        // Predicated region
        $region53: #{tpu_custom_call.1} parent=43 // pred_check
          %p891 = pneg %p196
        $region54: #{tpu_custom_call.1} parent=43 // pred_check_branch
          %893 = sbr.rel (%p891) target = $region56
        $region55: #{tpu_custom_call.1} parent=43 // pred_region
          %s894 = smul.u32 2, %s29
          %s896 = ssub.s32 1024, 1024
          %897 = vsyncadd %s887, %s896
          %s898 = smul.addr %s28, 16
          %s899 = sadd.s32 %s894, %s898
          %s900 = smul.addr %s899, 64
          %s901 = scalar_lea.hbm %s6, %s900
          %s902 = sshll.u32 %s890, 4
          %s903 = int_to_ptr.vmem [resolvable:$true] %s902
          %908 = dma.vmem_to_hbm [thread:$0]  %s903, 1024, %s901, %s887, 128, 128, 8
        $region56: #{tpu_custom_call.1} parent=43 // pred_fallthru
          _
      $region44: #{tpu_custom_call.1} parent=5 // pred_fallthru
        _
      %p909 = scmp.le.s32.totalorder 2, %s19
      // Predicated region
      $region57: #{tpu_custom_call.1} parent=5 // pred_check
        %p910 = pneg %p909
      $region58: #{tpu_custom_call.1} parent=5 // pred_check_branch
        %912 = sbr.rel (%p910) target = $region60
      $region59: #{tpu_custom_call.1} parent=5 // pred_region
        %s913 = ssub.s32 %s19, 2
        // Predicated region
        $region61: #{tpu_custom_call.1} parent=59 // pred_check
          %p914 = pneg %p202
        $region62: #{tpu_custom_call.1} parent=59 // pred_check_branch
          %916 = sbr.rel (%p914) target = $region64
        $region63: #{tpu_custom_call.1} parent=59 // pred_region
          %s917 = sand.u32 %s187, 1
          %s918 = scalar_lea.sflag [#allocation4], %s917
          %s919 = sand.u32 %s187, 1
          %s920 = smul.addr %s919, 64
          %s921 = scalar_lea.vmem [#allocation7], %s920
          %922 = dma.done %s918, 1024
        $region64: #{tpu_custom_call.1} parent=59 // pred_fallthru
          _
      $region60: #{tpu_custom_call.1} parent=5 // pred_fallthru
        _
    $region6: #{tpu_custom_call.1} parent=1 // loop_footer
      %s23 = sadd.s32 1, %s19
    $region7: #{tpu_custom_call.1} parent=1 // loop_footer_branch
      %18 = sbr.rel target = $region3
    $region8: #{tpu_custom_call.1} parent=1 // loop_exit
      _
    %923 = vsyncpa [#allocation3], 1
    %s924 = scalar_lea.sflag [#allocation3], 1
    %925 = vsyncpa %s924, 1
    %926 = vsyncpa [#allocation6], 1
    %927 = vsyncpa [#allocation4], 1
    %s928 = scalar_lea.sflag [#allocation4], 1
    %929 = vsyncpa %s928, 1

</llo_original>
